<compile_context>
chip_gen: v6e
topology: v6e:2x2x1
jax: 0.10.0
libtpu: 0.0.40
codegen_flags: <defaults>
</compile_context>

<pallas_src>
import jax
import jax.numpy as jnp
from jax.experimental import pallas as pl
from jax.experimental.pallas import tpu as pltpu

_LANE = 128


# ----------------------------------------------------------------------------
# VPU path: tiny channel counts. x block (B, Cin, S_tile, 128); w/b in SMEM.
# ----------------------------------------------------------------------------
def _conv1x1_sigmoid_vpu_kernel(x_ref, w_ref, b_ref, o_ref):
    # x_ref: (B, Cin, S_tile, 128) VMEM
    # w_ref: (Cout*Cin,) SMEM     b_ref: (Cout,) SMEM
    # o_ref: (B, Cout, S_tile, 128) VMEM
    bb = x_ref.shape[0]
    cin = x_ref.shape[1]
    cout = o_ref.shape[1]
    for n in range(bb):
        # Hoist each dense per-channel slab load out of the output-channel loop.
        x_slabs = [x_ref[n, c].astype(jnp.float32) for c in range(cin)]
        for o in range(cout):
            # Two independent partial sums to break the serial VALU chain.
            acc0 = x_slabs[0] * w_ref[o * cin + 0]
            acc1 = None
            for c in range(1, cin):
                term = x_slabs[c] * w_ref[o * cin + c]
                if (c % 2 == 1) and cin >= 4:
                    acc1 = term if acc1 is None else acc1 + term
                else:
                    acc0 = acc0 + term
            y = acc0 if acc1 is None else acc0 + acc1
            y = y + b_ref[o]
            o_ref[n, o] = jax.nn.sigmoid(y).astype(o_ref.dtype)


def _vpu_path(x_nchw, weight, bias):
    N, Cin, H, W = x_nchw.shape
    Cout = weight.shape[0]
    HW = H * W
    S = pl.cdiv(HW, _LANE)
    HW_pad = S * _LANE

    x3 = x_nchw.reshape(N, Cin, HW)
    if HW_pad != HW:
        x3 = jnp.pad(x3, ((0, 0), (0, 0), (0, HW_pad - HW)))
    x4 = x3.reshape(N, Cin, S, _LANE)

    w_flat = weight.reshape(Cout * Cin).astype(jnp.float32)
    b_vec = bias.reshape(Cout).astype(jnp.float32)

    total_bytes = N * S * 4 * _LANE * (Cin + Cout)         # full in+out footprint
    budget = 8 * 1024 * 1024                               # per-step soft budget

    if 2 * total_bytes <= 4 * 1024 * 1024:
        # Tiny problem: one grid step over the whole tensor (kills the
        # ~0.35us/step pipeline overhead at demo-sized shapes).
        grid = (1,)
        in_specs = [
            pl.BlockSpec((N, Cin, S, _LANE), lambda i: (0, 0, 0, 0)),
            pl.BlockSpec(memory_space=pltpu.MemorySpace.SMEM),
            pl.BlockSpec(memory_space=pltpu.MemorySpace.SMEM),
        ]
        out_specs = pl.BlockSpec((N, Cout, S, _LANE), lambda i: (0, 0, 0, 0))
        dim_sem = ("arbitrary",)
    else:
        bytes_per_srow = 2 * 4 * _LANE * (Cin + Cout)      # dbl-buffered in+out
        s_tile = max(8, (budget // bytes_per_srow) // 8 * 8)
        if s_tile >= S:
            s_tile = S                                     # full extent: always legal
        n_s = pl.cdiv(S, s_tile)                           # padded edge block is fine
        if n_s >= N:                                       # bigger parallel axis first
            grid = (n_s, N)
            xo_map = lambda s, n: (n, 0, s, 0)
        else:
            grid = (N, n_s)
            xo_map = lambda n, s: (n, 0, s, 0)
        in_specs = [
            pl.BlockSpec((1, Cin, s_tile, _LANE), xo_map),
            pl.BlockSpec(memory_space=pltpu.MemorySpace.SMEM),
            pl.BlockSpec(memory_space=pltpu.MemorySpace.SMEM),
        ]
        out_specs = pl.BlockSpec((1, Cout, s_tile, _LANE), xo_map)
        dim_sem = ("parallel", "parallel")

    out4 = pl.pallas_call(
        _conv1x1_sigmoid_vpu_kernel,
        out_shape=jax.ShapeDtypeStruct((N, Cout, S, _LANE), x_nchw.dtype),
        grid_spec=pltpu.PrefetchScalarGridSpec(
            num_scalar_prefetch=0,
            grid=grid,
            in_specs=in_specs,
            out_specs=out_specs,
        ),
        compiler_params=pltpu.CompilerParams(
            dimension_semantics=dim_sem,
            vmem_limit_bytes=32 * 1024 * 1024,   # do not raise above 32 MiB (v7x)
        ),
    )(x4, w_flat, b_vec)

    out3 = out4.reshape(N, Cout, HW_pad)
    if HW_pad != HW:
        out3 = out3[:, :, :HW]
    return out3.reshape(N, Cout, H, W)


# ----------------------------------------------------------------------------
# MXU path: larger channel counts. Lane-dense (N, Cin, HW) layout, f32 matmul.
# ----------------------------------------------------------------------------
def _conv1x1_sigmoid_mxu_kernel(x_ref, w_ref, b_ref, o_ref):
    x = x_ref[...]                       # (1, Cin, T)
    w = w_ref[...]                       # (Cout, Cin)
    b = b_ref[...]                       # (Cout, 1)
    y = jnp.einsum("oc,bct->bot", w, x, preferred_element_type=jnp.float32)
    y = y + b[None].astype(jnp.float32)
    o_ref[...] = jax.nn.sigmoid(y).astype(o_ref.dtype)


def _mxu_path(x_nchw, weight, bias):
    N, Cin, H, W = x_nchw.shape
    Cout = weight.shape[0]
    HW = H * W

    x3 = x_nchw.reshape(N, Cin, HW)
    w_mat = weight.reshape(Cout, Cin)
    b_mat = bias.reshape(Cout, 1)

    budget = 8 * 1024 * 1024
    full_bytes = 2 * 4 * HW * (Cin + Cout)     # dbl-buffered in+out at full extent
    if full_bytes <= budget or HW <= _LANE:
        hw_tile = HW                           # full-extent block (always legal)
    else:
        per_lane = 2 * 4 * (Cin + Cout)
        hw_tile = max(_LANE, (budget // per_lane) // _LANE * _LANE)
        hw_tile = min(hw_tile, pl.cdiv(HW, _LANE) * _LANE)
    n_t = pl.cdiv(HW, hw_tile)

    if n_t >= N:                               # larger parallel axis first (megacore)
        grid = (n_t, N)
        xo_map = lambda t, n: (n, 0, t)
        wb_map = lambda t, n: (0, 0)
    else:
        grid = (N, n_t)
        xo_map = lambda n, t: (n, 0, t)
        wb_map = lambda n, t: (0, 0)

    out3 = pl.pallas_call(
        _conv1x1_sigmoid_mxu_kernel,
        out_shape=jax.ShapeDtypeStruct((N, Cout, HW), x_nchw.dtype),
        grid_spec=pltpu.PrefetchScalarGridSpec(
            num_scalar_prefetch=0,
            grid=grid,
            in_specs=[
                pl.BlockSpec((1, Cin, hw_tile), xo_map),
                pl.BlockSpec((Cout, Cin), wb_map),
                pl.BlockSpec((Cout, 1), wb_map),
            ],
            out_specs=pl.BlockSpec((1, Cout, hw_tile), xo_map),
        ),
        compiler_params=pltpu.CompilerParams(
            dimension_semantics=("parallel", "parallel"),
            vmem_limit_bytes=32 * 1024 * 1024,
        ),
    )(x3, w_mat, b_mat)
    return out3.reshape(N, Cout, H, W)


@jax.jit
def conv1x1_sigmoid(x_nchw, weight, bias):
    """Equivalent of torch.sigmoid(nn.Conv2d(Cin, Cout, 1)(x)).

    x_nchw : (N, Cin, H, W) float32
    weight : (Cout, Cin, 1, 1) float32   (PyTorch conv weight shape)
    bias   : (Cout,) float32
    returns: (N, Cout, H, W) float32
    """
    _, Cin, _, _ = x_nchw.shape
    Cout = weight.shape[0]
    # VPU path only while 2*Cin*Cout ops/output stays under the HBM roofline;
    # larger heads ride the MXU and remain memory-bound (critical on v7x).
    if Cin * Cout <= 4 * (Cin + Cout):
        return _vpu_path(x_nchw, weight, bias)
    return _mxu_path(x_nchw, weight, bias)


def _reference(x_nchw, weight, bias):
    # Pure-JAX reference of torch.sigmoid(F.conv2d(x, weight, bias)) for 1x1 conv.
    w = weight.reshape(weight.shape[0], weight.shape[1])  # (Cout, Cin)
    y = jnp.einsum("nchw,oc->nohw", x_nchw, w) + bias[None, :, None, None]
    return jax.nn.sigmoid(y)


if __name__ == "__main__":
    key = jax.random.PRNGKey(0)

    def make_case(k, n, cin, cout, h, w):
        k_x, k_w, k_b = jax.random.split(k, 3)
        x = jax.random.normal(k_x, (n, cin, h, w), dtype=jnp.float32)
        bound = 1.0 / jnp.sqrt(jnp.float32(cin))
        weight = jax.random.uniform(k_w, (cout, cin, 1, 1), dtype=jnp.float32,
                                    minval=-bound, maxval=bound)
        bias = jax.random.uniform(k_b, (cout,), dtype=jnp.float32,
                                  minval=-bound, maxval=bound)
        return x, weight, bias

    k0, k1, k2 = jax.random.split(key, 3)
    cases = [
        make_case(k0, 2, 4, 8, 16, 16),    # primary: VPU/SMEM-splat path
        make_case(k1, 2, 16, 16, 16, 16),  # MXU path (larger channel count)
        make_case(k2, 2, 4, 1, 5, 5),      # VPU path, ragged H*W (padded to 128)
    ]
    for x, weight, bias in cases:
        out = jax.block_until_ready(conv1x1_sigmoid(x, weight, bias))
        ref = _reference(x, weight, bias)
        assert out.shape == ref.shape, (out.shape, ref.shape)
        assert jnp.allclose(out, ref, atol=1e-5, rtol=1e-5), (
            float(jnp.max(jnp.abs(out - ref))))

    print("KERNEL_OK")
</pallas_src>

<mosaic_0001>
module attributes {stable_mosaic.version = 11 : i64} {
  func.func @_conv1x1_sigmoid_vpu_kernel(%arg0: i32, %arg1: memref<2x4x2x128xf32, #tpu.memory_space<vmem>>, %arg2: memref<32xf32, #tpu.memory_space<smem>>, %arg3: memref<8xf32, #tpu.memory_space<smem>>, %arg4: memref<2x8x2x128xf32, #tpu.memory_space<vmem>>) attributes {dimension_semantics = [#tpu.dimension_semantics<arbitrary>], iteration_bounds = array<i64: 1>, scalar_prefetch = 0 : i64, scratch_operands = 0 : i64, tpu.core_type = #tpu.core_type<tc>, window_params = [{pipeline_mode = #tpu.pipeline_mode<synchronous>, transform_indices = @transform_0, window_bounds = array<i64: 2, 4, 2, 128>}, {transform_indices = @transform_1, window_bounds = array<i64: 32>}, {transform_indices = @transform_2, window_bounds = array<i64: 8>}, {pipeline_mode = #tpu.pipeline_mode<synchronous>, transform_indices = @transform_3, window_bounds = array<i64: 2, 8, 2, 128>}]} {
    %c0 = arith.constant 0 : index
    %c0_0 = arith.constant 0 : index
    %c0_1 = arith.constant 0 : index
    %c0_2 = arith.constant 0 : index
    %0 = vector.load %arg1[%c0, %c0_0, %c0_1, %c0_2] : memref<2x4x2x128xf32, #tpu.memory_space<vmem>>, vector<1x1x2x128xf32>
    %1 = vector.shape_cast %0 : vector<1x1x2x128xf32> to vector<2x128xf32>
    %c0_3 = arith.constant 0 : index
    %c1 = arith.constant 1 : index
    %c0_4 = arith.constant 0 : index
    %c0_5 = arith.constant 0 : index
    %2 = vector.load %arg1[%c0_3, %c1, %c0_4, %c0_5] : memref<2x4x2x128xf32, #tpu.memory_space<vmem>>, vector<1x1x2x128xf32>
    %3 = vector.shape_cast %2 : vector<1x1x2x128xf32> to vector<2x128xf32>
    %c0_6 = arith.constant 0 : index
    %c2 = arith.constant 2 : index
    %c0_7 = arith.constant 0 : index
    %c0_8 = arith.constant 0 : index
    %4 = vector.load %arg1[%c0_6, %c2, %c0_7, %c0_8] : memref<2x4x2x128xf32, #tpu.memory_space<vmem>>, vector<1x1x2x128xf32>
    %5 = vector.shape_cast %4 : vector<1x1x2x128xf32> to vector<2x128xf32>
    %c0_9 = arith.constant 0 : index
    %c3 = arith.constant 3 : index
    %c0_10 = arith.constant 0 : index
    %c0_11 = arith.constant 0 : index
    %6 = vector.load %arg1[%c0_9, %c3, %c0_10, %c0_11] : memref<2x4x2x128xf32, #tpu.memory_space<vmem>>, vector<1x1x2x128xf32>
    %7 = vector.shape_cast %6 : vector<1x1x2x128xf32> to vector<2x128xf32>
    %c0_12 = arith.constant 0 : index
    %8 = memref.load %arg2[%c0_12] : memref<32xf32, #tpu.memory_space<smem>>
    %9 = vector.broadcast %8 : f32 to vector<2x128xf32>
    %10 = arith.mulf %1, %9 : vector<2x128xf32>
    %c1_13 = arith.constant 1 : index
    %11 = memref.load %arg2[%c1_13] : memref<32xf32, #tpu.memory_space<smem>>
    %12 = vector.broadcast %11 : f32 to vector<2x128xf32>
    %13 = arith.mulf %3, %12 : vector<2x128xf32>
    %c2_14 = arith.constant 2 : index
    %14 = memref.load %arg2[%c2_14] : memref<32xf32, #tpu.memory_space<smem>>
    %15 = vector.broadcast %14 : f32 to vector<2x128xf32>
    %16 = arith.mulf %5, %15 : vector<2x128xf32>
    %17 = arith.addf %10, %16 : vector<2x128xf32>
    %c3_15 = arith.constant 3 : index
    %18 = memref.load %arg2[%c3_15] : memref<32xf32, #tpu.memory_space<smem>>
    %19 = vector.broadcast %18 : f32 to vector<2x128xf32>
    %20 = arith.mulf %7, %19 : vector<2x128xf32>
    %21 = arith.addf %13, %20 : vector<2x128xf32>
    %22 = arith.addf %17, %21 : vector<2x128xf32>
    %c0_16 = arith.constant 0 : index
    %23 = memref.load %arg3[%c0_16] : memref<8xf32, #tpu.memory_space<smem>>
    %24 = vector.broadcast %23 : f32 to vector<2x128xf32>
    %25 = arith.addf %22, %24 : vector<2x128xf32>
    %26 = arith.negf %25 : vector<2x128xf32>
    %27 = math.exp %26 : vector<2x128xf32>
    %cst = arith.constant 1.000000e+00 : f32
    %28 = vector.broadcast %cst : f32 to vector<2x128xf32>
    %29 = arith.addf %28, %27 : vector<2x128xf32>
    %30 = arith.divf %28, %29 : vector<2x128xf32>
    %c0_17 = arith.constant 0 : index
    %c0_18 = arith.constant 0 : index
    %c0_19 = arith.constant 0 : index
    %c0_20 = arith.constant 0 : index
    %31 = vector.load %arg4[%c0_17, %c0_18, %c0_19, %c0_20] : memref<2x8x2x128xf32, #tpu.memory_space<vmem>>, vector<1x1x2x128xf32>
    %32 = vector.shape_cast %31 : vector<1x1x2x128xf32> to vector<2x128xf32>
    %33 = vector.shape_cast %30 : vector<2x128xf32> to vector<1x1x2x128xf32>
    tpu.vector_store %arg4[%c0_17, %c0_18, %c0_19, %c0_20], %33 {strides = array<i32>} : memref<2x8x2x128xf32, #tpu.memory_space<vmem>>, vector<1x1x2x128xf32>,
    %c4 = arith.constant 4 : index
    %34 = memref.load %arg2[%c4] : memref<32xf32, #tpu.memory_space<smem>>
    %35 = vector.broadcast %34 : f32 to vector<2x128xf32>
    %36 = arith.mulf %1, %35 : vector<2x128xf32>
    %c5 = arith.constant 5 : index
    %37 = memref.load %arg2[%c5] : memref<32xf32, #tpu.memory_space<smem>>
    %38 = vector.broadcast %37 : f32 to vector<2x128xf32>
    %39 = arith.mulf %3, %38 : vector<2x128xf32>
    %c6 = arith.constant 6 : index
    %40 = memref.load %arg2[%c6] : memref<32xf32, #tpu.memory_space<smem>>
    %41 = vector.broadcast %40 : f32 to vector<2x128xf32>
    %42 = arith.mulf %5, %41 : vector<2x128xf32>
    %43 = arith.addf %36, %42 : vector<2x128xf32>
    %c7 = arith.constant 7 : index
    %44 = memref.load %arg2[%c7] : memref<32xf32, #tpu.memory_space<smem>>
    %45 = vector.broadcast %44 : f32 to vector<2x128xf32>
    %46 = arith.mulf %7, %45 : vector<2x128xf32>
    %47 = arith.addf %39, %46 : vector<2x128xf32>
    %48 = arith.addf %43, %47 : vector<2x128xf32>
    %c1_21 = arith.constant 1 : index
    %49 = memref.load %arg3[%c1_21] : memref<8xf32, #tpu.memory_space<smem>>
    %50 = vector.broadcast %49 : f32 to vector<2x128xf32>
    %51 = arith.addf %48, %50 : vector<2x128xf32>
    %52 = arith.negf %51 : vector<2x128xf32>
    %53 = math.exp %52 : vector<2x128xf32>
    %cst_22 = arith.constant 1.000000e+00 : f32
    %54 = vector.broadcast %cst_22 : f32 to vector<2x128xf32>
    %55 = arith.addf %54, %53 : vector<2x128xf32>
    %56 = arith.divf %54, %55 : vector<2x128xf32>
    %c0_23 = arith.constant 0 : index
    %c1_24 = arith.constant 1 : index
    %c0_25 = arith.constant 0 : index
    %c0_26 = arith.constant 0 : index
    %57 = vector.load %arg4[%c0_23, %c1_24, %c0_25, %c0_26] : memref<2x8x2x128xf32, #tpu.memory_space<vmem>>, vector<1x1x2x128xf32>
    %58 = vector.shape_cast %57 : vector<1x1x2x128xf32> to vector<2x128xf32>
    %59 = vector.shape_cast %56 : vector<2x128xf32> to vector<1x1x2x128xf32>
    tpu.vector_store %arg4[%c0_23, %c1_24, %c0_25, %c0_26], %59 {strides = array<i32>} : memref<2x8x2x128xf32, #tpu.memory_space<vmem>>, vector<1x1x2x128xf32>,
    %c8 = arith.constant 8 : index
    %60 = memref.load %arg2[%c8] : memref<32xf32, #tpu.memory_space<smem>>
    %61 = vector.broadcast %60 : f32 to vector<2x128xf32>
    %62 = arith.mulf %1, %61 : vector<2x128xf32>
    %c9 = arith.constant 9 : index
    %63 = memref.load %arg2[%c9] : memref<32xf32, #tpu.memory_space<smem>>
    %64 = vector.broadcast %63 : f32 to vector<2x128xf32>
    %65 = arith.mulf %3, %64 : vector<2x128xf32>
    %c10 = arith.constant 10 : index
    %66 = memref.load %arg2[%c10] : memref<32xf32, #tpu.memory_space<smem>>
    %67 = vector.broadcast %66 : f32 to vector<2x128xf32>
    %68 = arith.mulf %5, %67 : vector<2x128xf32>
    %69 = arith.addf %62, %68 : vector<2x128xf32>
    %c11 = arith.constant 11 : index
    %70 = memref.load %arg2[%c11] : memref<32xf32, #tpu.memory_space<smem>>
    %71 = vector.broadcast %70 : f32 to vector<2x128xf32>
    %72 = arith.mulf %7, %71 : vector<2x128xf32>
    %73 = arith.addf %65, %72 : vector<2x128xf32>
    %74 = arith.addf %69, %73 : vector<2x128xf32>
    %c2_27 = arith.constant 2 : index
    %75 = memref.load %arg3[%c2_27] : memref<8xf32, #tpu.memory_space<smem>>
    %76 = vector.broadcast %75 : f32 to vector<2x128xf32>
    %77 = arith.addf %74, %76 : vector<2x128xf32>
    %78 = arith.negf %77 : vector<2x128xf32>
    %79 = math.exp %78 : vector<2x128xf32>
    %cst_28 = arith.constant 1.000000e+00 : f32
    %80 = vector.broadcast %cst_28 : f32 to vector<2x128xf32>
    %81 = arith.addf %80, %79 : vector<2x128xf32>
    %82 = arith.divf %80, %81 : vector<2x128xf32>
    %c0_29 = arith.constant 0 : index
    %c2_30 = arith.constant 2 : index
    %c0_31 = arith.constant 0 : index
    %c0_32 = arith.constant 0 : index
    %83 = vector.load %arg4[%c0_29, %c2_30, %c0_31, %c0_32] : memref<2x8x2x128xf32, #tpu.memory_space<vmem>>, vector<1x1x2x128xf32>
    %84 = vector.shape_cast %83 : vector<1x1x2x128xf32> to vector<2x128xf32>
    %85 = vector.shape_cast %82 : vector<2x128xf32> to vector<1x1x2x128xf32>
    tpu.vector_store %arg4[%c0_29, %c2_30, %c0_31, %c0_32], %85 {strides = array<i32>} : memref<2x8x2x128xf32, #tpu.memory_space<vmem>>, vector<1x1x2x128xf32>,
    %c12 = arith.constant 12 : index
    %86 = memref.load %arg2[%c12] : memref<32xf32, #tpu.memory_space<smem>>
    %87 = vector.broadcast %86 : f32 to vector<2x128xf32>
    %88 = arith.mulf %1, %87 : vector<2x128xf32>
    %c13 = arith.constant 13 : index
    %89 = memref.load %arg2[%c13] : memref<32xf32, #tpu.memory_space<smem>>
    %90 = vector.broadcast %89 : f32 to vector<2x128xf32>
    %91 = arith.mulf %3, %90 : vector<2x128xf32>
    %c14 = arith.constant 14 : index
    %92 = memref.load %arg2[%c14] : memref<32xf32, #tpu.memory_space<smem>>
    %93 = vector.broadcast %92 : f32 to vector<2x128xf32>
    %94 = arith.mulf %5, %93 : vector<2x128xf32>
    %95 = arith.addf %88, %94 : vector<2x128xf32>
    %c15 = arith.constant 15 : index
    %96 = memref.load %arg2[%c15] : memref<32xf32, #tpu.memory_space<smem>>
    %97 = vector.broadcast %96 : f32 to vector<2x128xf32>
    %98 = arith.mulf %7, %97 : vector<2x128xf32>
    %99 = arith.addf %91, %98 : vector<2x128xf32>
    %100 = arith.addf %95, %99 : vector<2x128xf32>
    %c3_33 = arith.constant 3 : index
    %101 = memref.load %arg3[%c3_33] : memref<8xf32, #tpu.memory_space<smem>>
    %102 = vector.broadcast %101 : f32 to vector<2x128xf32>
    %103 = arith.addf %100, %102 : vector<2x128xf32>
    %104 = arith.negf %103 : vector<2x128xf32>
    %105 = math.exp %104 : vector<2x128xf32>
    %cst_34 = arith.constant 1.000000e+00 : f32
    %106 = vector.broadcast %cst_34 : f32 to vector<2x128xf32>
    %107 = arith.addf %106, %105 : vector<2x128xf32>
    %108 = arith.divf %106, %107 : vector<2x128xf32>
    %c0_35 = arith.constant 0 : index
    %c3_36 = arith.constant 3 : index
    %c0_37 = arith.constant 0 : index
    %c0_38 = arith.constant 0 : index
    %109 = vector.load %arg4[%c0_35, %c3_36, %c0_37, %c0_38] : memref<2x8x2x128xf32, #tpu.memory_space<vmem>>, vector<1x1x2x128xf32>
    %110 = vector.shape_cast %109 : vector<1x1x2x128xf32> to vector<2x128xf32>
    %111 = vector.shape_cast %108 : vector<2x128xf32> to vector<1x1x2x128xf32>
    tpu.vector_store %arg4[%c0_35, %c3_36, %c0_37, %c0_38], %111 {strides = array<i32>} : memref<2x8x2x128xf32, #tpu.memory_space<vmem>>, vector<1x1x2x128xf32>,
    %c16 = arith.constant 16 : index
    %112 = memref.load %arg2[%c16] : memref<32xf32, #tpu.memory_space<smem>>
    %113 = vector.broadcast %112 : f32 to vector<2x128xf32>
    %114 = arith.mulf %1, %113 : vector<2x128xf32>
    %c17 = arith.constant 17 : index
    %115 = memref.load %arg2[%c17] : memref<32xf32, #tpu.memory_space<smem>>
    %116 = vector.broadcast %115 : f32 to vector<2x128xf32>
    %117 = arith.mulf %3, %116 : vector<2x128xf32>
    %c18 = arith.constant 18 : index
    %118 = memref.load %arg2[%c18] : memref<32xf32, #tpu.memory_space<smem>>
    %119 = vector.broadcast %118 : f32 to vector<2x128xf32>
    %120 = arith.mulf %5, %119 : vector<2x128xf32>
    %121 = arith.addf %114, %120 : vector<2x128xf32>
    %c19 = arith.constant 19 : index
    %122 = memref.load %arg2[%c19] : memref<32xf32, #tpu.memory_space<smem>>
    %123 = vector.broadcast %122 : f32 to vector<2x128xf32>
    %124 = arith.mulf %7, %123 : vector<2x128xf32>
    %125 = arith.addf %117, %124 : vector<2x128xf32>
    %126 = arith.addf %121, %125 : vector<2x128xf32>
    %c4_39 = arith.constant 4 : index
    %127 = memref.load %arg3[%c4_39] : memref<8xf32, #tpu.memory_space<smem>>
    %128 = vector.broadcast %127 : f32 to vector<2x128xf32>
    %129 = arith.addf %126, %128 : vector<2x128xf32>
    %130 = arith.negf %129 : vector<2x128xf32>
    %131 = math.exp %130 : vector<2x128xf32>
    %cst_40 = arith.constant 1.000000e+00 : f32
    %132 = vector.broadcast %cst_40 : f32 to vector<2x128xf32>
    %133 = arith.addf %132, %131 : vector<2x128xf32>
    %134 = arith.divf %132, %133 : vector<2x128xf32>
    %c0_41 = arith.constant 0 : index
    %c4_42 = arith.constant 4 : index
    %c0_43 = arith.constant 0 : index
    %c0_44 = arith.constant 0 : index
    %135 = vector.load %arg4[%c0_41, %c4_42, %c0_43, %c0_44] : memref<2x8x2x128xf32, #tpu.memory_space<vmem>>, vector<1x1x2x128xf32>
    %136 = vector.shape_cast %135 : vector<1x1x2x128xf32> to vector<2x128xf32>
    %137 = vector.shape_cast %134 : vector<2x128xf32> to vector<1x1x2x128xf32>
    tpu.vector_store %arg4[%c0_41, %c4_42, %c0_43, %c0_44], %137 {strides = array<i32>} : memref<2x8x2x128xf32, #tpu.memory_space<vmem>>, vector<1x1x2x128xf32>,
    %c20 = arith.constant 20 : index
    %138 = memref.load %arg2[%c20] : memref<32xf32, #tpu.memory_space<smem>>
    %139 = vector.broadcast %138 : f32 to vector<2x128xf32>
    %140 = arith.mulf %1, %139 : vector<2x128xf32>
    %c21 = arith.constant 21 : index
    %141 = memref.load %arg2[%c21] : memref<32xf32, #tpu.memory_space<smem>>
    %142 = vector.broadcast %141 : f32 to vector<2x128xf32>
    %143 = arith.mulf %3, %142 : vector<2x128xf32>
    %c22 = arith.constant 22 : index
    %144 = memref.load %arg2[%c22] : memref<32xf32, #tpu.memory_space<smem>>
    %145 = vector.broadcast %144 : f32 to vector<2x128xf32>
    %146 = arith.mulf %5, %145 : vector<2x128xf32>
    %147 = arith.addf %140, %146 : vector<2x128xf32>
    %c23 = arith.constant 23 : index
    %148 = memref.load %arg2[%c23] : memref<32xf32, #tpu.memory_space<smem>>
    %149 = vector.broadcast %148 : f32 to vector<2x128xf32>
    %150 = arith.mulf %7, %149 : vector<2x128xf32>
    %151 = arith.addf %143, %150 : vector<2x128xf32>
    %152 = arith.addf %147, %151 : vector<2x128xf32>
    %c5_45 = arith.constant 5 : index
    %153 = memref.load %arg3[%c5_45] : memref<8xf32, #tpu.memory_space<smem>>
    %154 = vector.broadcast %153 : f32 to vector<2x128xf32>
    %155 = arith.addf %152, %154 : vector<2x128xf32>
    %156 = arith.negf %155 : vector<2x128xf32>
    %157 = math.exp %156 : vector<2x128xf32>
    %cst_46 = arith.constant 1.000000e+00 : f32
    %158 = vector.broadcast %cst_46 : f32 to vector<2x128xf32>
    %159 = arith.addf %158, %157 : vector<2x128xf32>
    %160 = arith.divf %158, %159 : vector<2x128xf32>
    %c0_47 = arith.constant 0 : index
    %c5_48 = arith.constant 5 : index
    %c0_49 = arith.constant 0 : index
    %c0_50 = arith.constant 0 : index
    %161 = vector.load %arg4[%c0_47, %c5_48, %c0_49, %c0_50] : memref<2x8x2x128xf32, #tpu.memory_space<vmem>>, vector<1x1x2x128xf32>
    %162 = vector.shape_cast %161 : vector<1x1x2x128xf32> to vector<2x128xf32>
    %163 = vector.shape_cast %160 : vector<2x128xf32> to vector<1x1x2x128xf32>
    tpu.vector_store %arg4[%c0_47, %c5_48, %c0_49, %c0_50], %163 {strides = array<i32>} : memref<2x8x2x128xf32, #tpu.memory_space<vmem>>, vector<1x1x2x128xf32>,
    %c24 = arith.constant 24 : index
    %164 = memref.load %arg2[%c24] : memref<32xf32, #tpu.memory_space<smem>>
    %165 = vector.broadcast %164 : f32 to vector<2x128xf32>
    %166 = arith.mulf %1, %165 : vector<2x128xf32>
    %c25 = arith.constant 25 : index
    %167 = memref.load %arg2[%c25] : memref<32xf32, #tpu.memory_space<smem>>
    %168 = vector.broadcast %167 : f32 to vector<2x128xf32>
    %169 = arith.mulf %3, %168 : vector<2x128xf32>
    %c26 = arith.constant 26 : index
    %170 = memref.load %arg2[%c26] : memref<32xf32, #tpu.memory_space<smem>>
    %171 = vector.broadcast %170 : f32 to vector<2x128xf32>
    %172 = arith.mulf %5, %171 : vector<2x128xf32>
    %173 = arith.addf %166, %172 : vector<2x128xf32>
    %c27 = arith.constant 27 : index
    %174 = memref.load %arg2[%c27] : memref<32xf32, #tpu.memory_space<smem>>
    %175 = vector.broadcast %174 : f32 to vector<2x128xf32>
    %176 = arith.mulf %7, %175 : vector<2x128xf32>
    %177 = arith.addf %169, %176 : vector<2x128xf32>
    %178 = arith.addf %173, %177 : vector<2x128xf32>
    %c6_51 = arith.constant 6 : index
    %179 = memref.load %arg3[%c6_51] : memref<8xf32, #tpu.memory_space<smem>>
    %180 = vector.broadcast %179 : f32 to vector<2x128xf32>
    %181 = arith.addf %178, %180 : vector<2x128xf32>
    %182 = arith.negf %181 : vector<2x128xf32>
    %183 = math.exp %182 : vector<2x128xf32>
    %cst_52 = arith.constant 1.000000e+00 : f32
    %184 = vector.broadcast %cst_52 : f32 to vector<2x128xf32>
    %185 = arith.addf %184, %183 : vector<2x128xf32>
    %186 = arith.divf %184, %185 : vector<2x128xf32>
    %c0_53 = arith.constant 0 : index
    %c6_54 = arith.constant 6 : index
    %c0_55 = arith.constant 0 : index
    %c0_56 = arith.constant 0 : index
    %187 = vector.load %arg4[%c0_53, %c6_54, %c0_55, %c0_56] : memref<2x8x2x128xf32, #tpu.memory_space<vmem>>, vector<1x1x2x128xf32>
    %188 = vector.shape_cast %187 : vector<1x1x2x128xf32> to vector<2x128xf32>
    %189 = vector.shape_cast %186 : vector<2x128xf32> to vector<1x1x2x128xf32>
    tpu.vector_store %arg4[%c0_53, %c6_54, %c0_55, %c0_56], %189 {strides = array<i32>} : memref<2x8x2x128xf32, #tpu.memory_space<vmem>>, vector<1x1x2x128xf32>,
    %c28 = arith.constant 28 : index
    %190 = memref.load %arg2[%c28] : memref<32xf32, #tpu.memory_space<smem>>
    %191 = vector.broadcast %190 : f32 to vector<2x128xf32>
    %192 = arith.mulf %1, %191 : vector<2x128xf32>
    %c29 = arith.constant 29 : index
    %193 = memref.load %arg2[%c29] : memref<32xf32, #tpu.memory_space<smem>>
    %194 = vector.broadcast %193 : f32 to vector<2x128xf32>
    %195 = arith.mulf %3, %194 : vector<2x128xf32>
    %c30 = arith.constant 30 : index
    %196 = memref.load %arg2[%c30] : memref<32xf32, #tpu.memory_space<smem>>
    %197 = vector.broadcast %196 : f32 to vector<2x128xf32>
    %198 = arith.mulf %5, %197 : vector<2x128xf32>
    %199 = arith.addf %192, %198 : vector<2x128xf32>
    %c31 = arith.constant 31 : index
    %200 = memref.load %arg2[%c31] : memref<32xf32, #tpu.memory_space<smem>>
    %201 = vector.broadcast %200 : f32 to vector<2x128xf32>
    %202 = arith.mulf %7, %201 : vector<2x128xf32>
    %203 = arith.addf %195, %202 : vector<2x128xf32>
    %204 = arith.addf %199, %203 : vector<2x128xf32>
    %c7_57 = arith.constant 7 : index
    %205 = memref.load %arg3[%c7_57] : memref<8xf32, #tpu.memory_space<smem>>
    %206 = vector.broadcast %205 : f32 to vector<2x128xf32>
    %207 = arith.addf %204, %206 : vector<2x128xf32>
    %208 = arith.negf %207 : vector<2x128xf32>
    %209 = math.exp %208 : vector<2x128xf32>
    %cst_58 = arith.constant 1.000000e+00 : f32
    %210 = vector.broadcast %cst_58 : f32 to vector<2x128xf32>
    %211 = arith.addf %210, %209 : vector<2x128xf32>
    %212 = arith.divf %210, %211 : vector<2x128xf32>
    %c0_59 = arith.constant 0 : index
    %c7_60 = arith.constant 7 : index
    %c0_61 = arith.constant 0 : index
    %c0_62 = arith.constant 0 : index
    %213 = vector.load %arg4[%c0_59, %c7_60, %c0_61, %c0_62] : memref<2x8x2x128xf32, #tpu.memory_space<vmem>>, vector<1x1x2x128xf32>
    %214 = vector.shape_cast %213 : vector<1x1x2x128xf32> to vector<2x128xf32>
    %215 = vector.shape_cast %212 : vector<2x128xf32> to vector<1x1x2x128xf32>
    tpu.vector_store %arg4[%c0_59, %c7_60, %c0_61, %c0_62], %215 {strides = array<i32>} : memref<2x8x2x128xf32, #tpu.memory_space<vmem>>, vector<1x1x2x128xf32>,
    %c1_63 = arith.constant 1 : index
    %c0_64 = arith.constant 0 : index
    %c0_65 = arith.constant 0 : index
    %c0_66 = arith.constant 0 : index
    %216 = vector.load %arg1[%c1_63, %c0_64, %c0_65, %c0_66] : memref<2x4x2x128xf32, #tpu.memory_space<vmem>>, vector<1x1x2x128xf32>
    %217 = vector.shape_cast %216 : vector<1x1x2x128xf32> to vector<2x128xf32>
    %c1_67 = arith.constant 1 : index
    %c1_68 = arith.constant 1 : index
    %c0_69 = arith.constant 0 : index
    %c0_70 = arith.constant 0 : index
    %218 = vector.load %arg1[%c1_67, %c1_68, %c0_69, %c0_70] : memref<2x4x2x128xf32, #tpu.memory_space<vmem>>, vector<1x1x2x128xf32>
    %219 = vector.shape_cast %218 : vector<1x1x2x128xf32> to vector<2x128xf32>
    %c1_71 = arith.constant 1 : index
    %c2_72 = arith.constant 2 : index
    %c0_73 = arith.constant 0 : index
    %c0_74 = arith.constant 0 : index
    %220 = vector.load %arg1[%c1_71, %c2_72, %c0_73, %c0_74] : memref<2x4x2x128xf32, #tpu.memory_space<vmem>>, vector<1x1x2x128xf32>
    %221 = vector.shape_cast %220 : vector<1x1x2x128xf32> to vector<2x128xf32>
    %c1_75 = arith.constant 1 : index
    %c3_76 = arith.constant 3 : index
    %c0_77 = arith.constant 0 : index
    %c0_78 = arith.constant 0 : index
    %222 = vector.load %arg1[%c1_75, %c3_76, %c0_77, %c0_78] : memref<2x4x2x128xf32, #tpu.memory_space<vmem>>, vector<1x1x2x128xf32>
    %223 = vector.shape_cast %222 : vector<1x1x2x128xf32> to vector<2x128xf32>
    %c0_79 = arith.constant 0 : index
    %224 = memref.load %arg2[%c0_79] : memref<32xf32, #tpu.memory_space<smem>>
    %225 = vector.broadcast %224 : f32 to vector<2x128xf32>
    %226 = arith.mulf %217, %225 : vector<2x128xf32>
    %c1_80 = arith.constant 1 : index
    %227 = memref.load %arg2[%c1_80] : memref<32xf32, #tpu.memory_space<smem>>
    %228 = vector.broadcast %227 : f32 to vector<2x128xf32>
    %229 = arith.mulf %219, %228 : vector<2x128xf32>
    %c2_81 = arith.constant 2 : index
    %230 = memref.load %arg2[%c2_81] : memref<32xf32, #tpu.memory_space<smem>>
    %231 = vector.broadcast %230 : f32 to vector<2x128xf32>
    %232 = arith.mulf %221, %231 : vector<2x128xf32>
    %233 = arith.addf %226, %232 : vector<2x128xf32>
    %c3_82 = arith.constant 3 : index
    %234 = memref.load %arg2[%c3_82] : memref<32xf32, #tpu.memory_space<smem>>
    %235 = vector.broadcast %234 : f32 to vector<2x128xf32>
    %236 = arith.mulf %223, %235 : vector<2x128xf32>
    %237 = arith.addf %229, %236 : vector<2x128xf32>
    %238 = arith.addf %233, %237 : vector<2x128xf32>
    %c0_83 = arith.constant 0 : index
    %239 = memref.load %arg3[%c0_83] : memref<8xf32, #tpu.memory_space<smem>>
    %240 = vector.broadcast %239 : f32 to vector<2x128xf32>
    %241 = arith.addf %238, %240 : vector<2x128xf32>
    %242 = arith.negf %241 : vector<2x128xf32>
    %243 = math.exp %242 : vector<2x128xf32>
    %cst_84 = arith.constant 1.000000e+00 : f32
    %244 = vector.broadcast %cst_84 : f32 to vector<2x128xf32>
    %245 = arith.addf %244, %243 : vector<2x128xf32>
    %246 = arith.divf %244, %245 : vector<2x128xf32>
    %c1_85 = arith.constant 1 : index
    %c0_86 = arith.constant 0 : index
    %c0_87 = arith.constant 0 : index
    %c0_88 = arith.constant 0 : index
    %247 = vector.load %arg4[%c1_85, %c0_86, %c0_87, %c0_88] : memref<2x8x2x128xf32, #tpu.memory_space<vmem>>, vector<1x1x2x128xf32>
    %248 = vector.shape_cast %247 : vector<1x1x2x128xf32> to vector<2x128xf32>
    %249 = vector.shape_cast %246 : vector<2x128xf32> to vector<1x1x2x128xf32>
    tpu.vector_store %arg4[%c1_85, %c0_86, %c0_87, %c0_88], %249 {strides = array<i32>} : memref<2x8x2x128xf32, #tpu.memory_space<vmem>>, vector<1x1x2x128xf32>,
    %c4_89 = arith.constant 4 : index
    %250 = memref.load %arg2[%c4_89] : memref<32xf32, #tpu.memory_space<smem>>
    %251 = vector.broadcast %250 : f32 to vector<2x128xf32>
    %252 = arith.mulf %217, %251 : vector<2x128xf32>
    %c5_90 = arith.constant 5 : index
    %253 = memref.load %arg2[%c5_90] : memref<32xf32, #tpu.memory_space<smem>>
    %254 = vector.broadcast %253 : f32 to vector<2x128xf32>
    %255 = arith.mulf %219, %254 : vector<2x128xf32>
    %c6_91 = arith.constant 6 : index
    %256 = memref.load %arg2[%c6_91] : memref<32xf32, #tpu.memory_space<smem>>
    %257 = vector.broadcast %256 : f32 to vector<2x128xf32>
    %258 = arith.mulf %221, %257 : vector<2x128xf32>
    %259 = arith.addf %252, %258 : vector<2x128xf32>
    %c7_92 = arith.constant 7 : index
    %260 = memref.load %arg2[%c7_92] : memref<32xf32, #tpu.memory_space<smem>>
    %261 = vector.broadcast %260 : f32 to vector<2x128xf32>
    %262 = arith.mulf %223, %261 : vector<2x128xf32>
    %263 = arith.addf %255, %262 : vector<2x128xf32>
    %264 = arith.addf %259, %263 : vector<2x128xf32>
    %c1_93 = arith.constant 1 : index
    %265 = memref.load %arg3[%c1_93] : memref<8xf32, #tpu.memory_space<smem>>
    %266 = vector.broadcast %265 : f32 to vector<2x128xf32>
    %267 = arith.addf %264, %266 : vector<2x128xf32>
    %268 = arith.negf %267 : vector<2x128xf32>
    %269 = math.exp %268 : vector<2x128xf32>
    %cst_94 = arith.constant 1.000000e+00 : f32
    %270 = vector.broadcast %cst_94 : f32 to vector<2x128xf32>
    %271 = arith.addf %270, %269 : vector<2x128xf32>
    %272 = arith.divf %270, %271 : vector<2x128xf32>
    %c1_95 = arith.constant 1 : index
    %c1_96 = arith.constant 1 : index
    %c0_97 = arith.constant 0 : index
    %c0_98 = arith.constant 0 : index
    %273 = vector.load %arg4[%c1_95, %c1_96, %c0_97, %c0_98] : memref<2x8x2x128xf32, #tpu.memory_space<vmem>>, vector<1x1x2x128xf32>
    %274 = vector.shape_cast %273 : vector<1x1x2x128xf32> to vector<2x128xf32>
    %275 = vector.shape_cast %272 : vector<2x128xf32> to vector<1x1x2x128xf32>
    tpu.vector_store %arg4[%c1_95, %c1_96, %c0_97, %c0_98], %275 {strides = array<i32>} : memref<2x8x2x128xf32, #tpu.memory_space<vmem>>, vector<1x1x2x128xf32>,
    %c8_99 = arith.constant 8 : index
    %276 = memref.load %arg2[%c8_99] : memref<32xf32, #tpu.memory_space<smem>>
    %277 = vector.broadcast %276 : f32 to vector<2x128xf32>
    %278 = arith.mulf %217, %277 : vector<2x128xf32>
    %c9_100 = arith.constant 9 : index
    %279 = memref.load %arg2[%c9_100] : memref<32xf32, #tpu.memory_space<smem>>
    %280 = vector.broadcast %279 : f32 to vector<2x128xf32>
    %281 = arith.mulf %219, %280 : vector<2x128xf32>
    %c10_101 = arith.constant 10 : index
    %282 = memref.load %arg2[%c10_101] : memref<32xf32, #tpu.memory_space<smem>>
    %283 = vector.broadcast %282 : f32 to vector<2x128xf32>
    %284 = arith.mulf %221, %283 : vector<2x128xf32>
    %285 = arith.addf %278, %284 : vector<2x128xf32>
    %c11_102 = arith.constant 11 : index
    %286 = memref.load %arg2[%c11_102] : memref<32xf32, #tpu.memory_space<smem>>
    %287 = vector.broadcast %286 : f32 to vector<2x128xf32>
    %288 = arith.mulf %223, %287 : vector<2x128xf32>
    %289 = arith.addf %281, %288 : vector<2x128xf32>
    %290 = arith.addf %285, %289 : vector<2x128xf32>
    %c2_103 = arith.constant 2 : index
    %291 = memref.load %arg3[%c2_103] : memref<8xf32, #tpu.memory_space<smem>>
    %292 = vector.broadcast %291 : f32 to vector<2x128xf32>
    %293 = arith.addf %290, %292 : vector<2x128xf32>
    %294 = arith.negf %293 : vector<2x128xf32>
    %295 = math.exp %294 : vector<2x128xf32>
    %cst_104 = arith.constant 1.000000e+00 : f32
    %296 = vector.broadcast %cst_104 : f32 to vector<2x128xf32>
    %297 = arith.addf %296, %295 : vector<2x128xf32>
    %298 = arith.divf %296, %297 : vector<2x128xf32>
    %c1_105 = arith.constant 1 : index
    %c2_106 = arith.constant 2 : index
    %c0_107 = arith.constant 0 : index
    %c0_108 = arith.constant 0 : index
    %299 = vector.load %arg4[%c1_105, %c2_106, %c0_107, %c0_108] : memref<2x8x2x128xf32, #tpu.memory_space<vmem>>, vector<1x1x2x128xf32>
    %300 = vector.shape_cast %299 : vector<1x1x2x128xf32> to vector<2x128xf32>
    %301 = vector.shape_cast %298 : vector<2x128xf32> to vector<1x1x2x128xf32>
    tpu.vector_store %arg4[%c1_105, %c2_106, %c0_107, %c0_108], %301 {strides = array<i32>} : memref<2x8x2x128xf32, #tpu.memory_space<vmem>>, vector<1x1x2x128xf32>,
    %c12_109 = arith.constant 12 : index
    %302 = memref.load %arg2[%c12_109] : memref<32xf32, #tpu.memory_space<smem>>
    %303 = vector.broadcast %302 : f32 to vector<2x128xf32>
    %304 = arith.mulf %217, %303 : vector<2x128xf32>
    %c13_110 = arith.constant 13 : index
    %305 = memref.load %arg2[%c13_110] : memref<32xf32, #tpu.memory_space<smem>>
    %306 = vector.broadcast %305 : f32 to vector<2x128xf32>
    %307 = arith.mulf %219, %306 : vector<2x128xf32>
    %c14_111 = arith.constant 14 : index
    %308 = memref.load %arg2[%c14_111] : memref<32xf32, #tpu.memory_space<smem>>
    %309 = vector.broadcast %308 : f32 to vector<2x128xf32>
    %310 = arith.mulf %221, %309 : vector<2x128xf32>
    %311 = arith.addf %304, %310 : vector<2x128xf32>
    %c15_112 = arith.constant 15 : index
    %312 = memref.load %arg2[%c15_112] : memref<32xf32, #tpu.memory_space<smem>>
    %313 = vector.broadcast %312 : f32 to vector<2x128xf32>
    %314 = arith.mulf %223, %313 : vector<2x128xf32>
    %315 = arith.addf %307, %314 : vector<2x128xf32>
    %316 = arith.addf %311, %315 : vector<2x128xf32>
    %c3_113 = arith.constant 3 : index
    %317 = memref.load %arg3[%c3_113] : memref<8xf32, #tpu.memory_space<smem>>
    %318 = vector.broadcast %317 : f32 to vector<2x128xf32>
    %319 = arith.addf %316, %318 : vector<2x128xf32>
    %320 = arith.negf %319 : vector<2x128xf32>
    %321 = math.exp %320 : vector<2x128xf32>
    %cst_114 = arith.constant 1.000000e+00 : f32
    %322 = vector.broadcast %cst_114 : f32 to vector<2x128xf32>
    %323 = arith.addf %322, %321 : vector<2x128xf32>
    %324 = arith.divf %322, %323 : vector<2x128xf32>
    %c1_115 = arith.constant 1 : index
    %c3_116 = arith.constant 3 : index
    %c0_117 = arith.constant 0 : index
    %c0_118 = arith.constant 0 : index
    %325 = vector.load %arg4[%c1_115, %c3_116, %c0_117, %c0_118] : memref<2x8x2x128xf32, #tpu.memory_space<vmem>>, vector<1x1x2x128xf32>
    %326 = vector.shape_cast %325 : vector<1x1x2x128xf32> to vector<2x128xf32>
    %327 = vector.shape_cast %324 : vector<2x128xf32> to vector<1x1x2x128xf32>
    tpu.vector_store %arg4[%c1_115, %c3_116, %c0_117, %c0_118], %327 {strides = array<i32>} : memref<2x8x2x128xf32, #tpu.memory_space<vmem>>, vector<1x1x2x128xf32>,
    %c16_119 = arith.constant 16 : index
    %328 = memref.load %arg2[%c16_119] : memref<32xf32, #tpu.memory_space<smem>>
    %329 = vector.broadcast %328 : f32 to vector<2x128xf32>
    %330 = arith.mulf %217, %329 : vector<2x128xf32>
    %c17_120 = arith.constant 17 : index
    %331 = memref.load %arg2[%c17_120] : memref<32xf32, #tpu.memory_space<smem>>
    %332 = vector.broadcast %331 : f32 to vector<2x128xf32>
    %333 = arith.mulf %219, %332 : vector<2x128xf32>
    %c18_121 = arith.constant 18 : index
    %334 = memref.load %arg2[%c18_121] : memref<32xf32, #tpu.memory_space<smem>>
    %335 = vector.broadcast %334 : f32 to vector<2x128xf32>
    %336 = arith.mulf %221, %335 : vector<2x128xf32>
    %337 = arith.addf %330, %336 : vector<2x128xf32>
    %c19_122 = arith.constant 19 : index
    %338 = memref.load %arg2[%c19_122] : memref<32xf32, #tpu.memory_space<smem>>
    %339 = vector.broadcast %338 : f32 to vector<2x128xf32>
    %340 = arith.mulf %223, %339 : vector<2x128xf32>
    %341 = arith.addf %333, %340 : vector<2x128xf32>
    %342 = arith.addf %337, %341 : vector<2x128xf32>
    %c4_123 = arith.constant 4 : index
    %343 = memref.load %arg3[%c4_123] : memref<8xf32, #tpu.memory_space<smem>>
    %344 = vector.broadcast %343 : f32 to vector<2x128xf32>
    %345 = arith.addf %342, %344 : vector<2x128xf32>
    %346 = arith.negf %345 : vector<2x128xf32>
    %347 = math.exp %346 : vector<2x128xf32>
    %cst_124 = arith.constant 1.000000e+00 : f32
    %348 = vector.broadcast %cst_124 : f32 to vector<2x128xf32>
    %349 = arith.addf %348, %347 : vector<2x128xf32>
    %350 = arith.divf %348, %349 : vector<2x128xf32>
    %c1_125 = arith.constant 1 : index
    %c4_126 = arith.constant 4 : index
    %c0_127 = arith.constant 0 : index
    %c0_128 = arith.constant 0 : index
    %351 = vector.load %arg4[%c1_125, %c4_126, %c0_127, %c0_128] : memref<2x8x2x128xf32, #tpu.memory_space<vmem>>, vector<1x1x2x128xf32>
    %352 = vector.shape_cast %351 : vector<1x1x2x128xf32> to vector<2x128xf32>
    %353 = vector.shape_cast %350 : vector<2x128xf32> to vector<1x1x2x128xf32>
    tpu.vector_store %arg4[%c1_125, %c4_126, %c0_127, %c0_128], %353 {strides = array<i32>} : memref<2x8x2x128xf32, #tpu.memory_space<vmem>>, vector<1x1x2x128xf32>,
    %c20_129 = arith.constant 20 : index
    %354 = memref.load %arg2[%c20_129] : memref<32xf32, #tpu.memory_space<smem>>
    %355 = vector.broadcast %354 : f32 to vector<2x128xf32>
    %356 = arith.mulf %217, %355 : vector<2x128xf32>
    %c21_130 = arith.constant 21 : index
    %357 = memref.load %arg2[%c21_130] : memref<32xf32, #tpu.memory_space<smem>>
    %358 = vector.broadcast %357 : f32 to vector<2x128xf32>
    %359 = arith.mulf %219, %358 : vector<2x128xf32>
    %c22_131 = arith.constant 22 : index
    %360 = memref.load %arg2[%c22_131] : memref<32xf32, #tpu.memory_space<smem>>
    %361 = vector.broadcast %360 : f32 to vector<2x128xf32>
    %362 = arith.mulf %221, %361 : vector<2x128xf32>
    %363 = arith.addf %356, %362 : vector<2x128xf32>
    %c23_132 = arith.constant 23 : index
    %364 = memref.load %arg2[%c23_132] : memref<32xf32, #tpu.memory_space<smem>>
    %365 = vector.broadcast %364 : f32 to vector<2x128xf32>
    %366 = arith.mulf %223, %365 : vector<2x128xf32>
    %367 = arith.addf %359, %366 : vector<2x128xf32>
    %368 = arith.addf %363, %367 : vector<2x128xf32>
    %c5_133 = arith.constant 5 : index
    %369 = memref.load %arg3[%c5_133] : memref<8xf32, #tpu.memory_space<smem>>
    %370 = vector.broadcast %369 : f32 to vector<2x128xf32>
    %371 = arith.addf %368, %370 : vector<2x128xf32>
    %372 = arith.negf %371 : vector<2x128xf32>
    %373 = math.exp %372 : vector<2x128xf32>
    %cst_134 = arith.constant 1.000000e+00 : f32
    %374 = vector.broadcast %cst_134 : f32 to vector<2x128xf32>
    %375 = arith.addf %374, %373 : vector<2x128xf32>
    %376 = arith.divf %374, %375 : vector<2x128xf32>
    %c1_135 = arith.constant 1 : index
    %c5_136 = arith.constant 5 : index
    %c0_137 = arith.constant 0 : index
    %c0_138 = arith.constant 0 : index
    %377 = vector.load %arg4[%c1_135, %c5_136, %c0_137, %c0_138] : memref<2x8x2x128xf32, #tpu.memory_space<vmem>>, vector<1x1x2x128xf32>
    %378 = vector.shape_cast %377 : vector<1x1x2x128xf32> to vector<2x128xf32>
    %379 = vector.shape_cast %376 : vector<2x128xf32> to vector<1x1x2x128xf32>
    tpu.vector_store %arg4[%c1_135, %c5_136, %c0_137, %c0_138], %379 {strides = array<i32>} : memref<2x8x2x128xf32, #tpu.memory_space<vmem>>, vector<1x1x2x128xf32>,
    %c24_139 = arith.constant 24 : index
    %380 = memref.load %arg2[%c24_139] : memref<32xf32, #tpu.memory_space<smem>>
    %381 = vector.broadcast %380 : f32 to vector<2x128xf32>
    %382 = arith.mulf %217, %381 : vector<2x128xf32>
    %c25_140 = arith.constant 25 : index
    %383 = memref.load %arg2[%c25_140] : memref<32xf32, #tpu.memory_space<smem>>
    %384 = vector.broadcast %383 : f32 to vector<2x128xf32>
    %385 = arith.mulf %219, %384 : vector<2x128xf32>
    %c26_141 = arith.constant 26 : index
    %386 = memref.load %arg2[%c26_141] : memref<32xf32, #tpu.memory_space<smem>>
    %387 = vector.broadcast %386 : f32 to vector<2x128xf32>
    %388 = arith.mulf %221, %387 : vector<2x128xf32>
    %389 = arith.addf %382, %388 : vector<2x128xf32>
    %c27_142 = arith.constant 27 : index
    %390 = memref.load %arg2[%c27_142] : memref<32xf32, #tpu.memory_space<smem>>
    %391 = vector.broadcast %390 : f32 to vector<2x128xf32>
    %392 = arith.mulf %223, %391 : vector<2x128xf32>
    %393 = arith.addf %385, %392 : vector<2x128xf32>
    %394 = arith.addf %389, %393 : vector<2x128xf32>
    %c6_143 = arith.constant 6 : index
    %395 = memref.load %arg3[%c6_143] : memref<8xf32, #tpu.memory_space<smem>>
    %396 = vector.broadcast %395 : f32 to vector<2x128xf32>
    %397 = arith.addf %394, %396 : vector<2x128xf32>
    %398 = arith.negf %397 : vector<2x128xf32>
    %399 = math.exp %398 : vector<2x128xf32>
    %cst_144 = arith.constant 1.000000e+00 : f32
    %400 = vector.broadcast %cst_144 : f32 to vector<2x128xf32>
    %401 = arith.addf %400, %399 : vector<2x128xf32>
    %402 = arith.divf %400, %401 : vector<2x128xf32>
    %c1_145 = arith.constant 1 : index
    %c6_146 = arith.constant 6 : index
    %c0_147 = arith.constant 0 : index
    %c0_148 = arith.constant 0 : index
    %403 = vector.load %arg4[%c1_145, %c6_146, %c0_147, %c0_148] : memref<2x8x2x128xf32, #tpu.memory_space<vmem>>, vector<1x1x2x128xf32>
    %404 = vector.shape_cast %403 : vector<1x1x2x128xf32> to vector<2x128xf32>
    %405 = vector.shape_cast %402 : vector<2x128xf32> to vector<1x1x2x128xf32>
    tpu.vector_store %arg4[%c1_145, %c6_146, %c0_147, %c0_148], %405 {strides = array<i32>} : memref<2x8x2x128xf32, #tpu.memory_space<vmem>>, vector<1x1x2x128xf32>,
    %c28_149 = arith.constant 28 : index
    %406 = memref.load %arg2[%c28_149] : memref<32xf32, #tpu.memory_space<smem>>
    %407 = vector.broadcast %406 : f32 to vector<2x128xf32>
    %408 = arith.mulf %217, %407 : vector<2x128xf32>
    %c29_150 = arith.constant 29 : index
    %409 = memref.load %arg2[%c29_150] : memref<32xf32, #tpu.memory_space<smem>>
    %410 = vector.broadcast %409 : f32 to vector<2x128xf32>
    %411 = arith.mulf %219, %410 : vector<2x128xf32>
    %c30_151 = arith.constant 30 : index
    %412 = memref.load %arg2[%c30_151] : memref<32xf32, #tpu.memory_space<smem>>
    %413 = vector.broadcast %412 : f32 to vector<2x128xf32>
    %414 = arith.mulf %221, %413 : vector<2x128xf32>
    %415 = arith.addf %408, %414 : vector<2x128xf32>
    %c31_152 = arith.constant 31 : index
    %416 = memref.load %arg2[%c31_152] : memref<32xf32, #tpu.memory_space<smem>>
    %417 = vector.broadcast %416 : f32 to vector<2x128xf32>
    %418 = arith.mulf %223, %417 : vector<2x128xf32>
    %419 = arith.addf %411, %418 : vector<2x128xf32>
    %420 = arith.addf %415, %419 : vector<2x128xf32>
    %c7_153 = arith.constant 7 : index
    %421 = memref.load %arg3[%c7_153] : memref<8xf32, #tpu.memory_space<smem>>
    %422 = vector.broadcast %421 : f32 to vector<2x128xf32>
    %423 = arith.addf %420, %422 : vector<2x128xf32>
    %424 = arith.negf %423 : vector<2x128xf32>
    %425 = math.exp %424 : vector<2x128xf32>
    %cst_154 = arith.constant 1.000000e+00 : f32
    %426 = vector.broadcast %cst_154 : f32 to vector<2x128xf32>
    %427 = arith.addf %426, %425 : vector<2x128xf32>
    %428 = arith.divf %426, %427 : vector<2x128xf32>
    %c1_155 = arith.constant 1 : index
    %c7_156 = arith.constant 7 : index
    %c0_157 = arith.constant 0 : index
    %c0_158 = arith.constant 0 : index
    %429 = vector.load %arg4[%c1_155, %c7_156, %c0_157, %c0_158] : memref<2x8x2x128xf32, #tpu.memory_space<vmem>>, vector<1x1x2x128xf32>
    %430 = vector.shape_cast %429 : vector<1x1x2x128xf32> to vector<2x128xf32>
    %431 = vector.shape_cast %428 : vector<2x128xf32> to vector<1x1x2x128xf32>
    tpu.vector_store %arg4[%c1_155, %c7_156, %c0_157, %c0_158], %431 {strides = array<i32>} : memref<2x8x2x128xf32, #tpu.memory_space<vmem>>, vector<1x1x2x128xf32>,
    return
  }
  func.func @transform_0(%arg0: i32) -> (i32, i32, i32, i32) {
    %c0_i32 = arith.constant 0 : i32
    %c0_i32_0 = arith.constant 0 : i32
    %c0_i32_1 = arith.constant 0 : i32
    %c0_i32_2 = arith.constant 0 : i32
    %c0_i32_3 = arith.constant 0 : i32
    return %c0_i32, %c0_i32_0, %c0_i32_1, %c0_i32_2 : i32, i32, i32, i32
  }
  func.func @transform_1(%arg0: i32) -> i32 {
    %c0_i32 = arith.constant 0 : i32
    %c0_i32_0 = arith.constant 0 : i32
    return %c0_i32 : i32
  }
  func.func @transform_2(%arg0: i32) -> i32 {
    %c0_i32 = arith.constant 0 : i32
    %c0_i32_0 = arith.constant 0 : i32
    return %c0_i32 : i32
  }
  func.func @transform_3(%arg0: i32) -> (i32, i32, i32, i32) {
    %c0_i32 = arith.constant 0 : i32
    %c0_i32_0 = arith.constant 0 : i32
    %c0_i32_1 = arith.constant 0 : i32
    %c0_i32_2 = arith.constant 0 : i32
    %c0_i32_3 = arith.constant 0 : i32
    return %c0_i32, %c0_i32_0, %c0_i32_1, %c0_i32_2 : i32, i32, i32, i32
  }
}

</mosaic_0001>

<llo_original>
// kernel: conv1x1_sigmoid.1
$region0: #{conv1x1_sigmoid.1}
  #allocation0 [shape = 'u32[]', space=smem, size = 0x4, offset = 0x4, fixed_abs, tag = 'smem constant byte address 0x4 - core index']
  #allocation1 [shape = 'u32[144,128]{1,0:T(1,128)}', space=vmem, size = 0x12000, scoped, tag = 'internal scratch']
  %s0 = inlined_call_operand.vmem [shape: f32[2,4,2,128], index: 0, kind: input, shape index: {}]
  %s1 = inlined_call_operand.vmem [shape: f32[32], index: 1, kind: input, shape index: {}]
  %s2 = inlined_call_operand.vmem [shape: f32[8], index: 2, kind: input, shape index: {}]
  %s3 = inlined_call_operand.vmem [shape: f32[2,8,2,128], index: 3, kind: output, shape index: {}]
  %s4 = sld [smem:[#allocation0]]
  $region30: #{conv1x1_sigmoid.1} parent=0
    _
  %s6 = ssub.s32 1, %s4
  %s7 = scalar_select 0, %s6, %s4
  $region1: #{conv1x1_sigmoid.1} parent=0
    #allocation2 [shape = 'u8[512]{0}', space=smem, size = 0x200, scoped, tag = 'input window, operand 1, single buffered']
    #allocation3 [shape = 's32[1]{0}', space=sflag, size = 0x4, scoped, tag = 'scoped memory for conv1x1_sigmoid.1']
    #allocation4 [shape = 'u8[512]{0}', space=smem, size = 0x200, scoped, tag = 'input window, operand 2, single buffered']
    #allocation5 [shape = 's32[1]{0}', space=sflag, size = 0x4, scoped, tag = 'scoped memory for conv1x1_sigmoid.1']
    %8 = vsyncpa [#allocation3], 0
    %9 = vsyncpa [#allocation5], 0
    // Predicated region
    $region2: #{conv1x1_sigmoid.1} parent=1 // pred_check
      _
    $region3: #{conv1x1_sigmoid.1} parent=1 // pred_check_branch
      %11 = sbr.rel (0) target = $region5
    $region4: #{conv1x1_sigmoid.1} parent=1 // pred_region
      _
    $region5: #{conv1x1_sigmoid.1} parent=1 // pred_fallthru
      _
    // Predicated region
    $region6: #{conv1x1_sigmoid.1} parent=1 // pred_check
      _
    $region7: #{conv1x1_sigmoid.1} parent=1 // pred_check_branch
      %13 = sbr.rel (0) target = $region9
    $region8: #{conv1x1_sigmoid.1} parent=1 // pred_region
      %s15 = ssub.s32 16, 16
      %16 = vsyncadd [#allocation3], %s15
      %s18 = sshll.u32 %s1, 4
      %s19 = int_to_ptr.vmem [resolvable:$true] %s18
      %21 = dma.vmem_to_smem %s19, 16, [#allocation2], [#allocation3]
    $region9: #{conv1x1_sigmoid.1} parent=1 // pred_fallthru
      _
    // Predicated region
    $region10: #{conv1x1_sigmoid.1} parent=1 // pred_check
      _
    $region11: #{conv1x1_sigmoid.1} parent=1 // pred_check_branch
      %23 = sbr.rel (0) target = $region13
    $region12: #{conv1x1_sigmoid.1} parent=1 // pred_region
      %s25 = ssub.s32 16, 16
      %26 = vsyncadd [#allocation5], %s25
      %s28 = sshll.u32 %s2, 4
      %s29 = int_to_ptr.vmem [resolvable:$true] %s28
      %31 = dma.vmem_to_smem %s29, 16, [#allocation4], [#allocation5]
    $region13: #{conv1x1_sigmoid.1} parent=1 // pred_fallthru
      _
    // Predicated region
    $region14: #{conv1x1_sigmoid.1} parent=1 // pred_check
      _
    $region15: #{conv1x1_sigmoid.1} parent=1 // pred_check_branch
      %33 = sbr.rel (0) target = $region17
    $region16: #{conv1x1_sigmoid.1} parent=1 // pred_region
      %34 = dma.done [#allocation3], 16
    $region17: #{conv1x1_sigmoid.1} parent=1 // pred_fallthru
      _
    // Predicated region
    $region18: #{conv1x1_sigmoid.1} parent=1 // pred_check
      _
    $region19: #{conv1x1_sigmoid.1} parent=1 // pred_check_branch
      %36 = sbr.rel (0) target = $region21
    $region20: #{conv1x1_sigmoid.1} parent=1 // pred_region
      %37 = dma.done [#allocation5], 16
    $region21: #{conv1x1_sigmoid.1} parent=1 // pred_fallthru
      _
    %38 = sfence
    %v39 = vld [vmem:[%s0] sm:$0x3]
    %s40 = scalar_lea.vmem %s0, 2
    %v41 = vld [vmem:[%s40] sm:$0x3]
    %s42 = scalar_lea.vmem %s0, 4
    %v43 = vld [vmem:[%s42] sm:$0x3]
    %s44 = scalar_lea.vmem %s0, 6
    %v45 = vld [vmem:[%s44] sm:$0x3]
    %s46 = sld [smem:[#allocation2]]
    %v47 = vstv %s46
    %v48 = vmul.f32 %v39, %v47
    %s49 = sld [smem:[#allocation2 + $0x1]]
    %v50 = vstv %s49
    %v51 = vmul.f32 %v41, %v50
    %s52 = sld [smem:[#allocation2 + $0x2]]
    %v53 = vstv %s52
    %v54 = vmul.f32 %v43, %v53
    %v55 = vadd.f32 %v48, %v54
    %s56 = sld [smem:[#allocation2 + $0x3]]
    %v57 = vstv %s56
    %v58 = vmul.f32 %v45, %v57
    %v59 = vadd.f32 %v51, %v58
    %v60 = vadd.f32 %v55, %v59
    %s61 = sld [smem:[#allocation4]]
    %v62 = vstv %s61
    %v63 = vadd.f32 %v60, %v62
    %v64 = vxor.u32 %v63, 2147483648
    %v65 = vmul.f32 %v64, 1.442695
    %v66 = vpow.pop %v65
    %v67 = vadd.f32 %v66, 1.0
    %v68 = vrcp.pop %v67
    %v69 = vmul.f32 1.0, %v68
    %70 = vst [vmem:[%s3] sm:$0x3] %v69
    %s71 = sld [smem:[#allocation2 + $0x4]]
    %v72 = vstv %s71
    %v73 = vmul.f32 %v39, %v72
    %s74 = sld [smem:[#allocation2 + $0x5]]
    %v75 = vstv %s74
    %v76 = vmul.f32 %v41, %v75
    %s77 = sld [smem:[#allocation2 + $0x6]]
    %v78 = vstv %s77
    %v79 = vmul.f32 %v43, %v78
    %v80 = vadd.f32 %v73, %v79
    %s81 = sld [smem:[#allocation2 + $0x7]]
    %v82 = vstv %s81
    %v83 = vmul.f32 %v45, %v82
    %v84 = vadd.f32 %v76, %v83
    %v85 = vadd.f32 %v80, %v84
    %s86 = sld [smem:[#allocation4 + $0x1]]
    %v87 = vstv %s86
    %v88 = vadd.f32 %v85, %v87
    %v89 = vxor.u32 %v88, 2147483648
    %v90 = vmul.f32 %v89, 1.442695
    %v91 = vpow.pop %v90
    %v92 = vadd.f32 %v91, 1.0
    %v93 = vrcp.pop %v92
    %v94 = vmul.f32 1.0, %v93
    %s95 = scalar_lea.vmem %s3, 2
    %96 = vst [vmem:[%s95] sm:$0x3] %v94
    %s97 = sld [smem:[#allocation2 + $0x8]]
    %v98 = vstv %s97
    %v99 = vmul.f32 %v39, %v98
    %s100 = sld [smem:[#allocation2 + $0x9]]
    %v101 = vstv %s100
    %v102 = vmul.f32 %v41, %v101
    %s103 = sld [smem:[#allocation2 + $0xa]]
    %v104 = vstv %s103
    %v105 = vmul.f32 %v43, %v104
    %v106 = vadd.f32 %v99, %v105
    %s107 = sld [smem:[#allocation2 + $0xb]]
    %v108 = vstv %s107
    %v109 = vmul.f32 %v45, %v108
    %v110 = vadd.f32 %v102, %v109
    %v111 = vadd.f32 %v106, %v110
    %s112 = sld [smem:[#allocation4 + $0x2]]
    %v113 = vstv %s112
    %v114 = vadd.f32 %v111, %v113
    %v115 = vxor.u32 %v114, 2147483648
    %v116 = vmul.f32 %v115, 1.442695
    %v117 = vpow.pop %v116
    %v118 = vadd.f32 %v117, 1.0
    %v119 = vrcp.pop %v118
    %v120 = vmul.f32 1.0, %v119
    %s121 = scalar_lea.vmem %s3, 4
    %122 = vst [vmem:[%s121] sm:$0x3] %v120
    %s123 = sld [smem:[#allocation2 + $0xc]]
    %v124 = vstv %s123
    %v125 = vmul.f32 %v39, %v124
    %s126 = sld [smem:[#allocation2 + $0xd]]
    %v127 = vstv %s126
    %v128 = vmul.f32 %v41, %v127
    %s129 = sld [smem:[#allocation2 + $0xe]]
    %v130 = vstv %s129
    %v131 = vmul.f32 %v43, %v130
    %v132 = vadd.f32 %v125, %v131
    %s133 = sld [smem:[#allocation2 + $0xf]]
    %v134 = vstv %s133
    %v135 = vmul.f32 %v45, %v134
    %v136 = vadd.f32 %v128, %v135
    %v137 = vadd.f32 %v132, %v136
    %s138 = sld [smem:[#allocation4 + $0x3]]
    %v139 = vstv %s138
    %v140 = vadd.f32 %v137, %v139
    %v141 = vxor.u32 %v140, 2147483648
    %v142 = vmul.f32 %v141, 1.442695
    %v143 = vpow.pop %v142
    %v144 = vadd.f32 %v143, 1.0
    %v145 = vrcp.pop %v144
    %v146 = vmul.f32 1.0, %v145
    %s147 = scalar_lea.vmem %s3, 6
    %148 = vst [vmem:[%s147] sm:$0x3] %v146
    %s149 = sld [smem:[#allocation2 + $0x10]]
    %v150 = vstv %s149
    %v151 = vmul.f32 %v39, %v150
    %s152 = sld [smem:[#allocation2 + $0x11]]
    %v153 = vstv %s152
    %v154 = vmul.f32 %v41, %v153
    %s155 = sld [smem:[#allocation2 + $0x12]]
    %v156 = vstv %s155
    %v157 = vmul.f32 %v43, %v156
    %v158 = vadd.f32 %v151, %v157
    %s159 = sld [smem:[#allocation2 + $0x13]]
    %v160 = vstv %s159
    %v161 = vmul.f32 %v45, %v160
    %v162 = vadd.f32 %v154, %v161
    %v163 = vadd.f32 %v158, %v162
    %s164 = sld [smem:[#allocation4 + $0x4]]
    %v165 = vstv %s164
    %v166 = vadd.f32 %v163, %v165
    %v167 = vxor.u32 %v166, 2147483648
    %v168 = vmul.f32 %v167, 1.442695
    %v169 = vpow.pop %v168
    %v170 = vadd.f32 %v169, 1.0
    %v171 = vrcp.pop %v170
    %v172 = vmul.f32 1.0, %v171
    %s173 = scalar_lea.vmem %s3, 8
    %174 = vst [vmem:[%s173] sm:$0x3] %v172
    %s175 = sld [smem:[#allocation2 + $0x14]]
    %v176 = vstv %s175
    %v177 = vmul.f32 %v39, %v176
    %s178 = sld [smem:[#allocation2 + $0x15]]
    %v179 = vstv %s178
    %v180 = vmul.f32 %v41, %v179
    %s181 = sld [smem:[#allocation2 + $0x16]]
    %v182 = vstv %s181
    %v183 = vmul.f32 %v43, %v182
    %v184 = vadd.f32 %v177, %v183
    %s185 = sld [smem:[#allocation2 + $0x17]]
    %v186 = vstv %s185
    %v187 = vmul.f32 %v45, %v186
    %v188 = vadd.f32 %v180, %v187
    %v189 = vadd.f32 %v184, %v188
    %s190 = sld [smem:[#allocation4 + $0x5]]
    %v191 = vstv %s190
    %v192 = vadd.f32 %v189, %v191
    %v193 = vxor.u32 %v192, 2147483648
    %v194 = vmul.f32 %v193, 1.442695
    %v195 = vpow.pop %v194
    %v196 = vadd.f32 %v195, 1.0
    %v197 = vrcp.pop %v196
    %v198 = vmul.f32 1.0, %v197
    %s199 = scalar_lea.vmem %s3, 10
    %200 = vst [vmem:[%s199] sm:$0x3] %v198
    %s201 = sld [smem:[#allocation2 + $0x18]]
    %v202 = vstv %s201
    %v203 = vmul.f32 %v39, %v202
    %s204 = sld [smem:[#allocation2 + $0x19]]
    %v205 = vstv %s204
    %v206 = vmul.f32 %v41, %v205
    %s207 = sld [smem:[#allocation2 + $0x1a]]
    %v208 = vstv %s207
    %v209 = vmul.f32 %v43, %v208
    %v210 = vadd.f32 %v203, %v209
    %s211 = sld [smem:[#allocation2 + $0x1b]]
    %v212 = vstv %s211
    %v213 = vmul.f32 %v45, %v212
    %v214 = vadd.f32 %v206, %v213
    %v215 = vadd.f32 %v210, %v214
    %s216 = sld [smem:[#allocation4 + $0x6]]
    %v217 = vstv %s216
    %v218 = vadd.f32 %v215, %v217
    %v219 = vxor.u32 %v218, 2147483648
    %v220 = vmul.f32 %v219, 1.442695
    %v221 = vpow.pop %v220
    %v222 = vadd.f32 %v221, 1.0
    %v223 = vrcp.pop %v222
    %v224 = vmul.f32 1.0, %v223
    %s225 = scalar_lea.vmem %s3, 12
    %226 = vst [vmem:[%s225] sm:$0x3] %v224
    %s227 = sld [smem:[#allocation2 + $0x1c]]
    %v228 = vstv %s227
    %v229 = vmul.f32 %v39, %v228
    %s230 = sld [smem:[#allocation2 + $0x1d]]
    %v231 = vstv %s230
    %v232 = vmul.f32 %v41, %v231
    %s233 = sld [smem:[#allocation2 + $0x1e]]
    %v234 = vstv %s233
    %v235 = vmul.f32 %v43, %v234
    %v236 = vadd.f32 %v229, %v235
    %s237 = sld [smem:[#allocation2 + $0x1f]]
    %v238 = vstv %s237
    %v239 = vmul.f32 %v45, %v238
    %v240 = vadd.f32 %v232, %v239
    %v241 = vadd.f32 %v236, %v240
    %s242 = sld [smem:[#allocation4 + $0x7]]
    %v243 = vstv %s242
    %v244 = vadd.f32 %v241, %v243
    %v245 = vxor.u32 %v244, 2147483648
    %v246 = vmul.f32 %v245, 1.442695
    %v247 = vpow.pop %v246
    %v248 = vadd.f32 %v247, 1.0
    %v249 = vrcp.pop %v248
    %v250 = vmul.f32 1.0, %v249
    %s251 = scalar_lea.vmem %s3, 14
    %252 = vst [vmem:[%s251] sm:$0x3] %v250
    %s253 = scalar_lea.vmem %s0, 8
    %v254 = vld [vmem:[%s253] sm:$0x3]
    %s255 = scalar_lea.vmem %s0, 10
    %v256 = vld [vmem:[%s255] sm:$0x3]
    %s257 = scalar_lea.vmem %s0, 12
    %v258 = vld [vmem:[%s257] sm:$0x3]
    %s259 = scalar_lea.vmem %s0, 14
    %v260 = vld [vmem:[%s259] sm:$0x3]
    %s261 = sld [smem:[#allocation2]]
    %v262 = vstv %s261
    %v263 = vmul.f32 %v254, %v262
    %s264 = sld [smem:[#allocation2 + $0x1]]
    %v265 = vstv %s264
    %v266 = vmul.f32 %v256, %v265
    %s267 = sld [smem:[#allocation2 + $0x2]]
    %v268 = vstv %s267
    %v269 = vmul.f32 %v258, %v268
    %v270 = vadd.f32 %v263, %v269
    %s271 = sld [smem:[#allocation2 + $0x3]]
    %v272 = vstv %s271
    %v273 = vmul.f32 %v260, %v272
    %v274 = vadd.f32 %v266, %v273
    %v275 = vadd.f32 %v270, %v274
    %s276 = sld [smem:[#allocation4]]
    %v277 = vstv %s276
    %v278 = vadd.f32 %v275, %v277
    %v279 = vxor.u32 %v278, 2147483648
    %v280 = vmul.f32 %v279, 1.442695
    %v281 = vpow.pop %v280
    %v282 = vadd.f32 %v281, 1.0
    %v283 = vrcp.pop %v282
    %v284 = vmul.f32 1.0, %v283
    %s285 = scalar_lea.vmem %s3, 16
    %286 = vst [vmem:[%s285] sm:$0x3] %v284
    %s287 = sld [smem:[#allocation2 + $0x4]]
    %v288 = vstv %s287
    %v289 = vmul.f32 %v254, %v288
    %s290 = sld [smem:[#allocation2 + $0x5]]
    %v291 = vstv %s290
    %v292 = vmul.f32 %v256, %v291
    %s293 = sld [smem:[#allocation2 + $0x6]]
    %v294 = vstv %s293
    %v295 = vmul.f32 %v258, %v294
    %v296 = vadd.f32 %v289, %v295
    %s297 = sld [smem:[#allocation2 + $0x7]]
    %v298 = vstv %s297
    %v299 = vmul.f32 %v260, %v298
    %v300 = vadd.f32 %v292, %v299
    %v301 = vadd.f32 %v296, %v300
    %s302 = sld [smem:[#allocation4 + $0x1]]
    %v303 = vstv %s302
    %v304 = vadd.f32 %v301, %v303
    %v305 = vxor.u32 %v304, 2147483648
    %v306 = vmul.f32 %v305, 1.442695
    %v307 = vpow.pop %v306
    %v308 = vadd.f32 %v307, 1.0
    %v309 = vrcp.pop %v308
    %v310 = vmul.f32 1.0, %v309
    %s311 = scalar_lea.vmem %s3, 18
    %312 = vst [vmem:[%s311] sm:$0x3] %v310
    %s313 = sld [smem:[#allocation2 + $0x8]]
    %v314 = vstv %s313
    %v315 = vmul.f32 %v254, %v314
    %s316 = sld [smem:[#allocation2 + $0x9]]
    %v317 = vstv %s316
    %v318 = vmul.f32 %v256, %v317
    %s319 = sld [smem:[#allocation2 + $0xa]]
    %v320 = vstv %s319
    %v321 = vmul.f32 %v258, %v320
    %v322 = vadd.f32 %v315, %v321
    %s323 = sld [smem:[#allocation2 + $0xb]]
    %v324 = vstv %s323
    %v325 = vmul.f32 %v260, %v324
    %v326 = vadd.f32 %v318, %v325
    %v327 = vadd.f32 %v322, %v326
    %s328 = sld [smem:[#allocation4 + $0x2]]
    %v329 = vstv %s328
    %v330 = vadd.f32 %v327, %v329
    %v331 = vxor.u32 %v330, 2147483648
    %v332 = vmul.f32 %v331, 1.442695
    %v333 = vpow.pop %v332
    %v334 = vadd.f32 %v333, 1.0
    %v335 = vrcp.pop %v334
    %v336 = vmul.f32 1.0, %v335
    %s337 = scalar_lea.vmem %s3, 20
    %338 = vst [vmem:[%s337] sm:$0x3] %v336
    %s339 = sld [smem:[#allocation2 + $0xc]]
    %v340 = vstv %s339
    %v341 = vmul.f32 %v254, %v340
    %s342 = sld [smem:[#allocation2 + $0xd]]
    %v343 = vstv %s342
    %v344 = vmul.f32 %v256, %v343
    %s345 = sld [smem:[#allocation2 + $0xe]]
    %v346 = vstv %s345
    %v347 = vmul.f32 %v258, %v346
    %v348 = vadd.f32 %v341, %v347
    %s349 = sld [smem:[#allocation2 + $0xf]]
    %v350 = vstv %s349
    %v351 = vmul.f32 %v260, %v350
    %v352 = vadd.f32 %v344, %v351
    %v353 = vadd.f32 %v348, %v352
    %s354 = sld [smem:[#allocation4 + $0x3]]
    %v355 = vstv %s354
    %v356 = vadd.f32 %v353, %v355
    %v357 = vxor.u32 %v356, 2147483648
    %v358 = vmul.f32 %v357, 1.442695
    %v359 = vpow.pop %v358
    %v360 = vadd.f32 %v359, 1.0
    %v361 = vrcp.pop %v360
    %v362 = vmul.f32 1.0, %v361
    %s363 = scalar_lea.vmem %s3, 22
    %364 = vst [vmem:[%s363] sm:$0x3] %v362
    %s365 = sld [smem:[#allocation2 + $0x10]]
    %v366 = vstv %s365
    %v367 = vmul.f32 %v254, %v366
    %s368 = sld [smem:[#allocation2 + $0x11]]
    %v369 = vstv %s368
    %v370 = vmul.f32 %v256, %v369
    %s371 = sld [smem:[#allocation2 + $0x12]]
    %v372 = vstv %s371
    %v373 = vmul.f32 %v258, %v372
    %v374 = vadd.f32 %v367, %v373
    %s375 = sld [smem:[#allocation2 + $0x13]]
    %v376 = vstv %s375
    %v377 = vmul.f32 %v260, %v376
    %v378 = vadd.f32 %v370, %v377
    %v379 = vadd.f32 %v374, %v378
    %s380 = sld [smem:[#allocation4 + $0x4]]
    %v381 = vstv %s380
    %v382 = vadd.f32 %v379, %v381
    %v383 = vxor.u32 %v382, 2147483648
    %v384 = vmul.f32 %v383, 1.442695
    %v385 = vpow.pop %v384
    %v386 = vadd.f32 %v385, 1.0
    %v387 = vrcp.pop %v386
    %v388 = vmul.f32 1.0, %v387
    %s389 = scalar_lea.vmem %s3, 24
    %390 = vst [vmem:[%s389] sm:$0x3] %v388
    %s391 = sld [smem:[#allocation2 + $0x14]]
    %v392 = vstv %s391
    %v393 = vmul.f32 %v254, %v392
    %s394 = sld [smem:[#allocation2 + $0x15]]
    %v395 = vstv %s394
    %v396 = vmul.f32 %v256, %v395
    %s397 = sld [smem:[#allocation2 + $0x16]]
    %v398 = vstv %s397
    %v399 = vmul.f32 %v258, %v398
    %v400 = vadd.f32 %v393, %v399
    %s401 = sld [smem:[#allocation2 + $0x17]]
    %v402 = vstv %s401
    %v403 = vmul.f32 %v260, %v402
    %v404 = vadd.f32 %v396, %v403
    %v405 = vadd.f32 %v400, %v404
    %s406 = sld [smem:[#allocation4 + $0x5]]
    %v407 = vstv %s406
    %v408 = vadd.f32 %v405, %v407
    %v409 = vxor.u32 %v408, 2147483648
    %v410 = vmul.f32 %v409, 1.442695
    %v411 = vpow.pop %v410
    %v412 = vadd.f32 %v411, 1.0
    %v413 = vrcp.pop %v412
    %v414 = vmul.f32 1.0, %v413
    %s415 = scalar_lea.vmem %s3, 26
    %416 = vst [vmem:[%s415] sm:$0x3] %v414
    %s417 = sld [smem:[#allocation2 + $0x18]]
    %v418 = vstv %s417
    %v419 = vmul.f32 %v254, %v418
    %s420 = sld [smem:[#allocation2 + $0x19]]
    %v421 = vstv %s420
    %v422 = vmul.f32 %v256, %v421
    %s423 = sld [smem:[#allocation2 + $0x1a]]
    %v424 = vstv %s423
    %v425 = vmul.f32 %v258, %v424
    %v426 = vadd.f32 %v419, %v425
    %s427 = sld [smem:[#allocation2 + $0x1b]]
    %v428 = vstv %s427
    %v429 = vmul.f32 %v260, %v428
    %v430 = vadd.f32 %v422, %v429
    %v431 = vadd.f32 %v426, %v430
    %s432 = sld [smem:[#allocation4 + $0x6]]
    %v433 = vstv %s432
    %v434 = vadd.f32 %v431, %v433
    %v435 = vxor.u32 %v434, 2147483648
    %v436 = vmul.f32 %v435, 1.442695
    %v437 = vpow.pop %v436
    %v438 = vadd.f32 %v437, 1.0
    %v439 = vrcp.pop %v438
    %v440 = vmul.f32 1.0, %v439
    %s441 = scalar_lea.vmem %s3, 28
    %442 = vst [vmem:[%s441] sm:$0x3] %v440
    %s443 = sld [smem:[#allocation2 + $0x1c]]
    %v444 = vstv %s443
    %v445 = vmul.f32 %v254, %v444
    %s446 = sld [smem:[#allocation2 + $0x1d]]
    %v447 = vstv %s446
    %v448 = vmul.f32 %v256, %v447
    %s449 = sld [smem:[#allocation2 + $0x1e]]
    %v450 = vstv %s449
    %v451 = vmul.f32 %v258, %v450
    %v452 = vadd.f32 %v445, %v451
    %s453 = sld [smem:[#allocation2 + $0x1f]]
    %v454 = vstv %s453
    %v455 = vmul.f32 %v260, %v454
    %v456 = vadd.f32 %v448, %v455
    %v457 = vadd.f32 %v452, %v456
    %s458 = sld [smem:[#allocation4 + $0x7]]
    %v459 = vstv %s458
    %v460 = vadd.f32 %v457, %v459
    %v461 = vxor.u32 %v460, 2147483648
    %v462 = vmul.f32 %v461, 1.442695
    %v463 = vpow.pop %v462
    %v464 = vadd.f32 %v463, 1.0
    %v465 = vrcp.pop %v464
    %v466 = vmul.f32 1.0, %v465
    %s467 = scalar_lea.vmem %s3, 30
    %468 = vst [vmem:[%s467] sm:$0x3] %v466
    // Predicated region
    $region22: #{conv1x1_sigmoid.1} parent=1 // pred_check
      _
    $region23: #{conv1x1_sigmoid.1} parent=1 // pred_check_branch
      %470 = sbr.rel (0) target = $region25
    $region24: #{conv1x1_sigmoid.1} parent=1 // pred_region
      _
    $region25: #{conv1x1_sigmoid.1} parent=1 // pred_fallthru
      _
    // Predicated region
    $region26: #{conv1x1_sigmoid.1} parent=1 // pred_check
      _
    $region27: #{conv1x1_sigmoid.1} parent=1 // pred_check_branch
      %472 = sbr.rel (0) target = $region29
    $region28: #{conv1x1_sigmoid.1} parent=1 // pred_region
      _
    $region29: #{conv1x1_sigmoid.1} parent=1 // pred_fallthru
      _
    %473 = vsyncpa [#allocation3], 1
    %474 = vsyncpa [#allocation5], 1

</llo_original>
